<compile_context>
chip_gen: v7x
topology: tpu7x:2x2x1
jax: 0.10.0
libtpu: 0.0.40
codegen_flags: <defaults>
</compile_context>

<pallas_src>
import functools

import jax
import jax.numpy as jnp
from jax.experimental import pallas as pl
from jax.experimental.pallas import tpu as pltpu


def _round_up(x, m):
    return ((x + m - 1) // m) * m


def _fit_divisor(total, tile):
    """Largest multiple of 128 <= tile that divides total (total % 128 == 0)."""
    tile = min(tile, total)
    tile = max(128, (tile // 128) * 128)
    while total % tile != 0:
        tile -= 128
    return tile


# ---------------------------------------------------------------------------
# One-time weight preparation (do this at weight-load time, NOT per forward).
# ---------------------------------------------------------------------------
def prepare_expert_weights(wg, wu, wd):
    """Repack PyTorch-layout weights into the kernel layout, once.

    wg, wu: gate_proj / up_proj weights, shape (I, H)  (nn.Linear (out, in))
    wd:     down_proj weight,            shape (H, I)

    Returns (wg_t, wu_t, wd_t):
        wg_t, wu_t: (H_pad, I_pad)   -- (in, out) layout
        wd_t:       (I_pad, H_pad)
    padded to multiples of 128. Zero padding is semantically inert: padded I
    columns give gate = up = 0 and padded wd rows are 0; padded H columns of
    the output are sliced off in the forward.
    """
    I, H = wg.shape
    H_pad = _round_up(H, 128)
    I_pad = _round_up(I, 128)
    wg_t = jnp.asarray(wg).T
    wu_t = jnp.asarray(wu).T
    wd_t = jnp.asarray(wd).T
    if (H_pad, I_pad) != (H, I):
        wg_t = jnp.pad(wg_t, ((0, H_pad - H), (0, I_pad - I)))
        wu_t = jnp.pad(wu_t, ((0, H_pad - H), (0, I_pad - I)))
        wd_t = jnp.pad(wd_t, ((0, I_pad - I), (0, H_pad - H)))
    return wg_t, wu_t, wd_t


# ---------------------------------------------------------------------------
# Per-generation tile / VMEM-limit selection.
# ---------------------------------------------------------------------------
def _select_config(M, H_pad, I_pad, x_itemsize, w_itemsize,
                   block_m=None, block_i=None):
    try:
        vmem_cap = int(pltpu.get_tpu_info().vmem_capacity_bytes)
    except Exception:
        vmem_cap = 64 * 1024 * 1024  # conservative fallback: fits every gen
    small_vmem = vmem_cap <= 96 * 1024 * 1024  # v7x-class: 64 MiB/TC, 2 TCs

    # Defaults: multiples of 256 feed the 256-wide MXU; bigger tm on 128-MiB
    # parts to get past the HBM balance point, smaller tiles on 64-MiB parts.
    if block_m is None:
        block_m = 256 if small_vmem else 512
    if block_i is None:
        block_i = 256 if small_vmem else 512

    tm = min(_round_up(block_m, 8), _round_up(M, 8))
    if small_vmem and M > 8:
        # 2 TensorCores: make sure the "parallel" M axis has >= 2 tiles.
        while tm > 8 and -(-M // tm) < 2:
            tm = _round_up(max(tm // 2, 8), 8)

    ti = _fit_divisor(I_pad, _round_up(block_i, 128))

    budget = int(vmem_cap * 0.85)

    def footprint(tm_, ti_):
        return (2 * tm_ * H_pad * x_itemsize          # x tile (double-buffered)
                + 2 * 2 * H_pad * ti_ * w_itemsize    # gate + up weight tiles
                + 2 * ti_ * H_pad * w_itemsize        # down weight tile
                + 2 * tm_ * H_pad * x_itemsize        # output tile
                + tm_ * H_pad * 4)                    # f32 accumulator

    while footprint(tm, ti) > budget:
        if ti > 128:
            ti = _fit_divisor(I_pad, max(128, ti // 2))
        elif tm > 8:
            tm = _round_up(max(tm // 2, 8), 8)
        else:
            break

    vmem_limit = int(vmem_cap * 0.9)  # ~10% headroom for compiler scratch
    return tm, ti, vmem_limit


# ---------------------------------------------------------------------------
# Kernel.
# ---------------------------------------------------------------------------
def _expert_kernel(x_ref, wg_ref, wu_ref, wd_ref, o_ref, acc_ref):
    # x_ref:  (tm, H_pad)      token tile (native dtype)
    # wg_ref: (H_pad, ti)      gate_proj weight tile for I-block j
    # wu_ref: (H_pad, ti)      up_proj   weight tile for I-block j
    # wd_ref: (ti, H_pad)      down_proj weight tile for I-block j
    # o_ref:  (tm, H_pad)
    # acc_ref:(tm, H_pad) f32  accumulator across the I grid axis
    j = pl.program_id(1)

    x = x_ref[...]
    gate = jnp.dot(x, wg_ref[...], preferred_element_type=jnp.float32)
    up = jnp.dot(x, wu_ref[...], preferred_element_type=jnp.float32)

    # SwiGLU in f32 (sigmoid on EUP, muls on VPU), cast back for the MXU.
    hidden = (gate * jax.nn.sigmoid(gate) * up).astype(wd_ref.dtype)
    partial = jnp.dot(hidden, wd_ref[...], preferred_element_type=jnp.float32)

    @pl.when(j == 0)
    def _():
        acc_ref[...] = partial          # store (no zero-fill + read-add pass)

    @pl.when(j > 0)
    def _():
        acc_ref[...] += partial

    @pl.when(j == pl.num_programs(1) - 1)
    def _():
        o_ref[...] = acc_ref[...].astype(o_ref.dtype)


@functools.partial(jax.jit, static_argnames=("tm", "ti", "vmem_limit_bytes"))
def _expert_forward_impl(x2d, wg_t, wu_t, wd_t, *, tm, ti, vmem_limit_bytes):
    M, H = x2d.shape
    H_pad, I_pad = wg_t.shape
    M_pad = _round_up(M, tm)
    n_i = I_pad // ti

    xp = x2d
    if (M_pad, H_pad) != (M, H):          # pad only when actually needed
        xp = jnp.pad(x2d, ((0, M_pad - M), (0, H_pad - H)))

    out = pl.pallas_call(
        _expert_kernel,
        out_shape=jax.ShapeDtypeStruct((M_pad, H_pad), x2d.dtype),
        grid_spec=pltpu.PrefetchScalarGridSpec(
            num_scalar_prefetch=0,
            grid=(M_pad // tm, n_i),
            in_specs=[
                pl.BlockSpec((tm, H_pad), lambda i, j: (i, 0)),   # x tile
                pl.BlockSpec((H_pad, ti), lambda i, j: (0, j)),   # gate w tile
                pl.BlockSpec((H_pad, ti), lambda i, j: (0, j)),   # up   w tile
                pl.BlockSpec((ti, H_pad), lambda i, j: (j, 0)),   # down w tile
            ],
            out_specs=pl.BlockSpec((tm, H_pad), lambda i, j: (i, 0)),
            scratch_shapes=[pltpu.VMEM((tm, H_pad), jnp.float32)],
        ),
        compiler_params=pltpu.CompilerParams(
            dimension_semantics=("parallel", "arbitrary"),
            vmem_limit_bytes=vmem_limit_bytes,
        ),
    )(xp, wg_t, wu_t, wd_t)

    if (M_pad, H_pad) != (M, H):
        out = out[:M, :H]
    return out


def deepseek_expert_forward(x, prepared_weights, *, block_m=None, block_i=None):
    """x: (..., H). prepared_weights: output of prepare_expert_weights()."""
    wg_t, wu_t, wd_t = prepared_weights
    orig_shape = x.shape
    H = orig_shape[-1]
    x2d = x.reshape(-1, H)
    M = x2d.shape[0]
    H_pad, I_pad = wg_t.shape

    tm, ti, vmem_limit = _select_config(
        M, H_pad, I_pad,
        x_itemsize=jnp.dtype(x2d.dtype).itemsize,
        w_itemsize=jnp.dtype(wg_t.dtype).itemsize,
        block_m=block_m, block_i=block_i)

    out2d = _expert_forward_impl(x2d, wg_t, wu_t, wd_t,
                                 tm=tm, ti=ti, vmem_limit_bytes=vmem_limit)
    return out2d.reshape(orig_shape)


# ---------------------------------------------------------------------------
# Test helpers (mirror the PyTorch module).
# ---------------------------------------------------------------------------
def _init_linear_weight(key, out_features, in_features, dtype=jnp.float32):
    # nn.Linear default init: U(-1/sqrt(in), 1/sqrt(in)), shape (out, in).
    bound = 1.0 / (in_features ** 0.5)
    return jax.random.uniform(key, (out_features, in_features),
                              minval=-bound, maxval=bound, dtype=dtype)


def _reference_forward(x, wg, wu, wd):
    gate = x @ wg.T
    up = x @ wu.T
    h = jax.nn.silu(gate) * up
    return h @ wd.T


if __name__ == "__main__":
    key = jax.random.PRNGKey(0)

    # --- Test 1: toy shapes (exercises H/I/M padding), f32 -----------------
    B, S, H, I = 2, 8, 32, 64
    kx, kg, ku, kd, key = jax.random.split(key, 5)
    x = jax.random.normal(kx, (B, S, H), dtype=jnp.float32)
    wg = _init_linear_weight(kg, I, H)   # gate_proj.weight  (I, H)
    wu = _init_linear_weight(ku, I, H)   # up_proj.weight    (I, H)
    wd = _init_linear_weight(kd, H, I)   # down_proj.weight  (H, I)

    prepared = prepare_expert_weights(wg, wu, wd)   # one-time repack
    out = deepseek_expert_forward(x, prepared)
    out = jax.block_until_ready(out)
    ref = _reference_forward(x, wg, wu, wd)
    assert out.shape == (B, S, H)
    assert jnp.allclose(out, ref, atol=1e-2, rtol=1e-2), "f32 mismatch vs reference"

    # --- Test 2: bf16 path exercising M- and I-tiling + accumulator --------
    B2, S2, H2, I2 = 2, 256, 256, 1024
    kx2, kg2, ku2, kd2 = jax.random.split(key, 4)
    x2 = jax.random.normal(kx2, (B2, S2, H2), dtype=jnp.float32).astype(jnp.bfloat16)
    wg2 = _init_linear_weight(kg2, I2, H2).astype(jnp.bfloat16)
    wu2 = _init_linear_weight(ku2, I2, H2).astype(jnp.bfloat16)
    wd2 = _init_linear_weight(kd2, H2, I2).astype(jnp.bfloat16)

    prepared2 = prepare_expert_weights(wg2, wu2, wd2)
    out2 = deepseek_expert_forward(x2, prepared2, block_m=256, block_i=256)
    out2 = jax.block_until_ready(out2)
    ref2 = _reference_forward(x2.astype(jnp.float32), wg2.astype(jnp.float32),
                              wu2.astype(jnp.float32), wd2.astype(jnp.float32))
    max_err = jnp.max(jnp.abs(out2.astype(jnp.float32) - ref2))
    assert max_err < 5e-2, f"bf16 mismatch vs reference (max abs err {max_err})"

    print("KERNEL_OK")
</pallas_src>

<mosaic_0001>
module attributes {stable_mosaic.version = 11 : i64} {
  func.func @_expert_kernel(%arg0: i32, %arg1: i32, %arg2: memref<8x128xf32, #tpu.memory_space<vmem>>, %arg3: memref<128x128xf32, #tpu.memory_space<vmem>>, %arg4: memref<128x128xf32, #tpu.memory_space<vmem>>, %arg5: memref<128x128xf32, #tpu.memory_space<vmem>>, %arg6: memref<8x128xf32, #tpu.memory_space<vmem>>, %arg7: memref<8x128xf32, #tpu.memory_space<vmem>>) attributes {dimension_semantics = [#tpu.dimension_semantics<parallel>, #tpu.dimension_semantics<arbitrary>], iteration_bounds = array<i64: 2, 1>, scalar_prefetch = 0 : i64, scratch_operands = 1 : i64, tpu.core_type = #tpu.core_type<tc>, window_params = [{transform_indices = @transform_0, window_bounds = array<i64: 8, 128>}, {transform_indices = @transform_1, window_bounds = array<i64: 128, 128>}, {transform_indices = @transform_2, window_bounds = array<i64: 128, 128>}, {transform_indices = @transform_3, window_bounds = array<i64: 128, 128>}, {transform_indices = @transform_4, window_bounds = array<i64: 8, 128>}]} {
    %c0 = arith.constant 0 : index
    %c0_0 = arith.constant 0 : index
    %0 = vector.load %arg2[%c0, %c0_0] : memref<8x128xf32, #tpu.memory_space<vmem>>, vector<8x128xf32>
    %c0_1 = arith.constant 0 : index
    %c0_2 = arith.constant 0 : index
    %1 = vector.load %arg3[%c0_1, %c0_2] : memref<128x128xf32, #tpu.memory_space<vmem>>, vector<128x128xf32>
    %cst = arith.constant dense<0.000000e+00> : vector<8x128xf32>
    %2 = tpu.matmul %0, %1, %cst {dimension_numbers = #tpu.dot_dimension_numbers<[1], [0], [0], [1], [0, 0, 1, 1], [], []>} : vector<8x128xf32>, vector<128x128xf32>, vector<8x128xf32> -> vector<8x128xf32>
    %c0_3 = arith.constant 0 : index
    %c0_4 = arith.constant 0 : index
    %3 = vector.load %arg4[%c0_3, %c0_4] : memref<128x128xf32, #tpu.memory_space<vmem>>, vector<128x128xf32>
    %cst_5 = arith.constant dense<0.000000e+00> : vector<8x128xf32>
    %4 = tpu.matmul %0, %3, %cst_5 {dimension_numbers = #tpu.dot_dimension_numbers<[1], [0], [0], [1], [0, 0, 1, 1], [], []>} : vector<8x128xf32>, vector<128x128xf32>, vector<8x128xf32> -> vector<8x128xf32>
    %5 = arith.negf %2 : vector<8x128xf32>
    %6 = math.exp %5 : vector<8x128xf32>
    %cst_6 = arith.constant 1.000000e+00 : f32
    %7 = vector.broadcast %cst_6 : f32 to vector<8x128xf32>
    %8 = arith.addf %7, %6 : vector<8x128xf32>
    %9 = arith.divf %7, %8 : vector<8x128xf32>
    %10 = arith.mulf %2, %9 : vector<8x128xf32>
    %11 = arith.mulf %10, %4 : vector<8x128xf32>
    %c0_7 = arith.constant 0 : index
    %c0_8 = arith.constant 0 : index
    %12 = vector.load %arg5[%c0_7, %c0_8] : memref<128x128xf32, #tpu.memory_space<vmem>>, vector<128x128xf32>
    %cst_9 = arith.constant dense<0.000000e+00> : vector<8x128xf32>
    %13 = tpu.matmul %11, %12, %cst_9 {dimension_numbers = #tpu.dot_dimension_numbers<[1], [0], [0], [1], [0, 0, 1, 1], [], []>} : vector<8x128xf32>, vector<128x128xf32>, vector<8x128xf32> -> vector<8x128xf32>
    %c0_i32 = arith.constant 0 : i32
    %14 = arith.cmpi eq, %arg1, %c0_i32 : i32
    %15 = arith.extui %14 : i1 to i32
    %c0_i32_10 = arith.constant 0 : i32
    %16 = arith.cmpi ne, %15, %c0_i32_10 : i32
    scf.if %16 {
      %c0_15 = arith.constant 0 : index
      %c0_16 = arith.constant 0 : index
      %23 = vector.load %arg7[%c0_15, %c0_16] : memref<8x128xf32, #tpu.memory_space<vmem>>, vector<8x128xf32>
      tpu.vector_store %arg7[%c0_15, %c0_16], %13 {strides = array<i32>} : memref<8x128xf32, #tpu.memory_space<vmem>>, vector<8x128xf32>,
    } else {
    }
    %c0_i32_11 = arith.constant 0 : i32
    %17 = arith.cmpi sgt, %arg1, %c0_i32_11 : i32
    %18 = arith.extui %17 : i1 to i32
    %c0_i32_12 = arith.constant 0 : i32
    %19 = arith.cmpi ne, %18, %c0_i32_12 : i32
    scf.if %19 {
      %c0_15 = arith.constant 0 : index
      %c0_16 = arith.constant 0 : index
      %23 = vector.load %arg7[%c0_15, %c0_16] : memref<8x128xf32, #tpu.memory_space<vmem>>, vector<8x128xf32>
      %24 = arith.addf %23, %13 : vector<8x128xf32>
      %c0_17 = arith.constant 0 : index
      %c0_18 = arith.constant 0 : index
      %25 = vector.load %arg7[%c0_17, %c0_18] : memref<8x128xf32, #tpu.memory_space<vmem>>, vector<8x128xf32>
      tpu.vector_store %arg7[%c0_17, %c0_18], %24 {strides = array<i32>} : memref<8x128xf32, #tpu.memory_space<vmem>>, vector<8x128xf32>,
    } else {
    }
    %c0_i32_13 = arith.constant 0 : i32
    %20 = arith.cmpi eq, %arg1, %c0_i32_13 : i32
    %21 = arith.extui %20 : i1 to i32
    %c0_i32_14 = arith.constant 0 : i32
    %22 = arith.cmpi ne, %21, %c0_i32_14 : i32
    scf.if %22 {
      %c0_15 = arith.constant 0 : index
      %c0_16 = arith.constant 0 : index
      %23 = vector.load %arg7[%c0_15, %c0_16] : memref<8x128xf32, #tpu.memory_space<vmem>>, vector<8x128xf32>
      %c0_17 = arith.constant 0 : index
      %c0_18 = arith.constant 0 : index
      %24 = vector.load %arg6[%c0_17, %c0_18] : memref<8x128xf32, #tpu.memory_space<vmem>>, vector<8x128xf32>
      tpu.vector_store %arg6[%c0_17, %c0_18], %23 {strides = array<i32>} : memref<8x128xf32, #tpu.memory_space<vmem>>, vector<8x128xf32>,
    } else {
    }
    return
  }
  func.func @transform_0(%arg0: i32, %arg1: i32) -> (i32, i32) {
    %c0_i32 = arith.constant 0 : i32
    %c0_i32_0 = arith.constant 0 : i32
    return %arg0, %c0_i32 : i32, i32
  }
  func.func @transform_1(%arg0: i32, %arg1: i32) -> (i32, i32) {
    %c0_i32 = arith.constant 0 : i32
    %c0_i32_0 = arith.constant 0 : i32
    return %c0_i32, %arg1 : i32, i32
  }
  func.func @transform_2(%arg0: i32, %arg1: i32) -> (i32, i32) {
    %c0_i32 = arith.constant 0 : i32
    %c0_i32_0 = arith.constant 0 : i32
    return %c0_i32, %arg1 : i32, i32
  }
  func.func @transform_3(%arg0: i32, %arg1: i32) -> (i32, i32) {
    %c0_i32 = arith.constant 0 : i32
    %c0_i32_0 = arith.constant 0 : i32
    return %arg1, %c0_i32 : i32, i32
  }
  func.func @transform_4(%arg0: i32, %arg1: i32) -> (i32, i32) {
    %c0_i32 = arith.constant 0 : i32
    %c0_i32_0 = arith.constant 0 : i32
    return %arg0, %c0_i32 : i32, i32
  }
}

</mosaic_0001>

<llo_original>
// kernel: _expert_forward_impl.1
$region0: #{_expert_forward_impl.1}
  #allocation0 [shape = 'u32[]', space=smem, size = 0x4, offset = 0x4, fixed_abs, tag = 'smem constant byte address 0x4 - core index']
  #allocation1 [shape = 'u32[144,128]{1,0:T(1,128)}', space=vmem, size = 0x12000, scoped, tag = 'internal scratch']
  #allocation2 [shape = 'f32[8,128]{1,0:T(8,128)}', space=vmem, size = 0x1000, scoped, tag = 'scratch operand']
  %s0 = inlined_call_operand.vmem [shape: f32[16,128], index: 0, kind: input, shape index: {}]
  %s1 = inlined_call_operand.hbm [shape: f32[128,128], index: 1, kind: input, shape index: {}]
  %s2 = inlined_call_operand.hbm [shape: f32[128,128], index: 2, kind: input, shape index: {}]
  %s3 = inlined_call_operand.hbm [shape: f32[128,128], index: 3, kind: input, shape index: {}]
  %s4 = inlined_call_operand.hbm [shape: f32[16,128], index: 4, kind: output, shape index: {}]
  %s5 = sld [smem:[#allocation0]]
  $region73: #{_expert_forward_impl.1} parent=0
    _
  %s7 = ssub.s32 1, %s5
  %s8 = scalar_select 0, %s7, %s5
  $region1: #{_expert_forward_impl.1} parent=0
    #allocation3 [shape = 'u8[65536]{0}', space=vmem, size = 0x10000, scoped, tag = 'input window, operand 1, single buffered']
    #allocation4 [shape = 's32[2]{0}', space=sflag, size = 0x8, scoped, tag = 'scoped memory for _expert_forward_impl.1']
    #allocation5 [shape = 's32[2]{0}', space=sflag, size = 0x8, scoped, tag = 'scoped memory for _expert_forward_impl.1']
    #allocation6 [shape = 'u8[65536]{0}', space=vmem, size = 0x10000, scoped, tag = 'input window, operand 2, single buffered']
    #allocation7 [shape = 's32[1]{0}', space=sflag, size = 0x4, scoped, tag = 'scoped memory for _expert_forward_impl.1']
    #allocation8 [shape = 'u8[65536]{0}', space=vmem, size = 0x10000, scoped, tag = 'input window, operand 3, single buffered']
    #allocation9 [shape = 'u8[8192]{0}', space=vmem, size = 0x2000, scoped, tag = 'output window, operand 0']
    %9 = vsyncpa [#allocation4], 0
    %10 = vsyncpa [#allocation7], 0
    %11 = vsyncpa [#allocation5], 0
    %s12 = scalar_lea.sflag [#allocation5], 1
    %13 = vsyncpa %s12, 0
    loop: start=0, step=1, limit=4
    $region2: #{_expert_forward_impl.1} parent=1 // loop_pre_header
      _
    $region3: #{_expert_forward_impl.1} parent=1 // loop_header
      %s15 = sphi 0, %s19
      %p16 = scmp.ge.s32.totalorder %s15, 4
      %s22 = sphi 0, %s34
      %s23 = sphi 0, %s30
      %s24 = sphi 0, %s22
      %s25 = sphi 0, %s23
      %s26 = sphi 0, %s24
      %s27 = sphi 0, %s25
      %s37 = sphi 0, %s39
      %s40 = sphi 0, %s37
      %s41 = sphi 0, %s40
      %s57 = sphi 0, %s41
      %s63 = sphi 0, %s65
      %s66 = sphi 0, %s63
      %s67 = sphi 0, %s66
      %s83 = sphi 0, %s67
      %s89 = sphi 0, %s91
      %s92 = sphi 0, %s89
      %s93 = sphi 0, %s92
      %s109 = sphi 0, %s93
      %s115 = sphi 0, %s117
      %s118 = sphi 0, %s115
      %s119 = sphi 0, %s118
      %s135 = sphi 0, %s119
      %s141 = sphi 0, %s143
      %s144 = sphi 0, %s141
      %s145 = sphi 0, %s144
      %s161 = sphi 0, %s145
    $region4: #{_expert_forward_impl.1} parent=1 // loop_header_branch
      %18 = sbr.rel (%p16) target = $region8
    $region5: #{_expert_forward_impl.1} parent=1 // loop_body
      %s20 = ssub.s32 %s15, 1
      %s21 = ssub.s32 %s15, 2
      %s28 = sadd.s32 1, %s23
      %p29 = scmp.ge.s32.totalorder %s28, 1
      %s30 = scalar_select %p29, 0, %s28
      %s31 = sadd.s32 1, %s22
      %s32 = scalar_select %p29, %s31, %s22
      %p33 = scmp.ge.s32.totalorder %s32, 2
      %s34 = scalar_select %p33, 0, %s32
      %s35 = ssub.s32 %s22, %s34
      %p36 = scmp.eq.s32.totalorder %s35, 0
      %s38 = sadd.s32 %s37, 1
      %s39 = scalar_select %p36, %s37, %s38
      %p42 = pneg %p36
      %p43 = scmp.eq.s32.totalorder %s15, 1
      %p44 = por %p42, %p43
      %p45 = scmp.ne.s32.totalorder %s37, %s40
      %p46 = scmp.eq.s32.totalorder %s15, 0
      %p47 = por %p45, %p46
      %p48 = scmp.ne.s32.totalorder %s37, %s40
      %p49 = scmp.eq.s32.totalorder %s20, 1
      %p50 = por %p48, %p49
      %p51 = scmp.ne.s32.totalorder %s40, %s41
      %p52 = scmp.eq.s32.totalorder %s20, 0
      %p53 = por %p51, %p52
      %p54 = scmp.ne.s32.totalorder %s40, %s41
      %p55 = scmp.eq.s32.totalorder %s21, 1
      %p56 = por %p54, %p55
      %p58 = scmp.ne.s32.totalorder %s41, %s57
      %p59 = scmp.eq.s32.totalorder %s21, 0
      %p60 = por %p58, %p59
      %s61 = ssub.s32 %s23, %s30
      %p62 = scmp.eq.s32.totalorder %s61, 0
      %s64 = sadd.s32 %s63, 1
      %s65 = scalar_select %p62, %s63, %s64
      %p68 = pneg %p62
      %p69 = scmp.eq.s32.totalorder %s15, 1
      %p70 = por %p68, %p69
      %p71 = scmp.ne.s32.totalorder %s63, %s66
      %p72 = scmp.eq.s32.totalorder %s15, 0
      %p73 = por %p71, %p72
      %p74 = scmp.ne.s32.totalorder %s63, %s66
      %p75 = scmp.eq.s32.totalorder %s20, 1
      %p76 = por %p74, %p75
      %p77 = scmp.ne.s32.totalorder %s66, %s67
      %p78 = scmp.eq.s32.totalorder %s20, 0
      %p79 = por %p77, %p78
      %p80 = scmp.ne.s32.totalorder %s66, %s67
      %p81 = scmp.eq.s32.totalorder %s21, 1
      %p82 = por %p80, %p81
      %p84 = scmp.ne.s32.totalorder %s67, %s83
      %p85 = scmp.eq.s32.totalorder %s21, 0
      %p86 = por %p84, %p85
      %s87 = ssub.s32 %s23, %s30
      %p88 = scmp.eq.s32.totalorder %s87, 0
      %s90 = sadd.s32 %s89, 1
      %s91 = scalar_select %p88, %s89, %s90
      %p94 = pneg %p88
      %p95 = scmp.eq.s32.totalorder %s15, 1
      %p96 = por %p94, %p95
      %p97 = scmp.ne.s32.totalorder %s89, %s92
      %p98 = scmp.eq.s32.totalorder %s15, 0
      %p99 = por %p97, %p98
      %p100 = scmp.ne.s32.totalorder %s89, %s92
      %p101 = scmp.eq.s32.totalorder %s20, 1
      %p102 = por %p100, %p101
      %p103 = scmp.ne.s32.totalorder %s92, %s93
      %p104 = scmp.eq.s32.totalorder %s20, 0
      %p105 = por %p103, %p104
      %p106 = scmp.ne.s32.totalorder %s92, %s93
      %p107 = scmp.eq.s32.totalorder %s21, 1
      %p108 = por %p106, %p107
      %p110 = scmp.ne.s32.totalorder %s93, %s109
      %p111 = scmp.eq.s32.totalorder %s21, 0
      %p112 = por %p110, %p111
      %s113 = ssub.s32 %s23, %s30
      %p114 = scmp.eq.s32.totalorder %s113, 0
      %s116 = sadd.s32 %s115, 1
      %s117 = scalar_select %p114, %s115, %s116
      %p120 = pneg %p114
      %p121 = scmp.eq.s32.totalorder %s15, 1
      %p122 = por %p120, %p121
      %p123 = scmp.ne.s32.totalorder %s115, %s118
      %p124 = scmp.eq.s32.totalorder %s15, 0
      %p125 = por %p123, %p124
      %p126 = scmp.ne.s32.totalorder %s115, %s118
      %p127 = scmp.eq.s32.totalorder %s20, 1
      %p128 = por %p126, %p127
      %p129 = scmp.ne.s32.totalorder %s118, %s119
      %p130 = scmp.eq.s32.totalorder %s20, 0
      %p131 = por %p129, %p130
      %p132 = scmp.ne.s32.totalorder %s118, %s119
      %p133 = scmp.eq.s32.totalorder %s21, 1
      %p134 = por %p132, %p133
      %p136 = scmp.ne.s32.totalorder %s119, %s135
      %p137 = scmp.eq.s32.totalorder %s21, 0
      %p138 = por %p136, %p137
      %s139 = ssub.s32 %s22, %s34
      %p140 = scmp.eq.s32.totalorder %s139, 0
      %s142 = sadd.s32 %s141, 1
      %s143 = scalar_select %p140, %s141, %s142
      %p146 = pneg %p140
      %p147 = scmp.eq.s32.totalorder %s15, 1
      %p148 = por %p146, %p147
      %p149 = scmp.ne.s32.totalorder %s141, %s144
      %p150 = scmp.eq.s32.totalorder %s15, 0
      %p151 = por %p149, %p150
      %p152 = scmp.ne.s32.totalorder %s141, %s144
      %p153 = scmp.eq.s32.totalorder %s20, 1
      %p154 = por %p152, %p153
      %p155 = scmp.ne.s32.totalorder %s144, %s145
      %p156 = scmp.eq.s32.totalorder %s20, 0
      %p157 = por %p155, %p156
      %p158 = scmp.ne.s32.totalorder %s144, %s145
      %p159 = scmp.eq.s32.totalorder %s21, 1
      %p160 = por %p158, %p159
      %p162 = scmp.ne.s32.totalorder %s145, %s161
      %p163 = scmp.eq.s32.totalorder %s21, 0
      %p164 = por %p162, %p163
      %p165 = scmp.le.s32.totalorder 1, %s15
      %p166 = scmp.lt.s32.totalorder %s15, 3
      %p167 = pnand %p165, %p166
      %p168 = pneg %p167
      // Predicated region
      $region9: #{_expert_forward_impl.1} parent=5 // pred_check
        _
      $region10: #{_expert_forward_impl.1} parent=5 // pred_check_branch
        %170 = sbr.rel (%p167) target = $region12
      $region11: #{_expert_forward_impl.1} parent=5 // pred_region
        %s171 = ssub.s32 %s15, 1
        // Predicated region
        $region13: #{_expert_forward_impl.1} parent=11 // pred_check
          %p172 = pneg %p79
        $region14: #{_expert_forward_impl.1} parent=11 // pred_check_branch
          %174 = sbr.rel (%p172) target = $region16
        $region15: #{_expert_forward_impl.1} parent=11 // pred_region
          %s176 = ssub.s32 2048, 2048
          %177 = vsyncadd [#allocation4], %s176
          %s178 = smul.addr %s25, 128
          %s179 = scalar_lea.hbm %s1, %s178
          %s180 = sshll.u32 [#allocation3], 4
          %s181 = int_to_ptr.vmem [resolvable:$true] %s180
          %186 = dma.hbm_to_vmem [thread:$0]  %s179, 2048, %s181, [#allocation4], 128, 128, 8
        $region16: #{_expert_forward_impl.1} parent=11 // pred_fallthru
          _
        // Predicated region
        $region17: #{_expert_forward_impl.1} parent=11 // pred_check
          %p187 = pneg %p105
        $region18: #{_expert_forward_impl.1} parent=11 // pred_check_branch
          %189 = sbr.rel (%p187) target = $region20
        $region19: #{_expert_forward_impl.1} parent=11 // pred_region
          %s191 = ssub.s32 2048, 2048
          %192 = vsyncadd [#allocation7], %s191
          %s193 = smul.addr %s25, 128
          %s194 = scalar_lea.hbm %s2, %s193
          %s195 = sshll.u32 [#allocation6], 4
          %s196 = int_to_ptr.vmem [resolvable:$true] %s195
          %201 = dma.hbm_to_vmem [thread:$0]  %s194, 2048, %s196, [#allocation7], 128, 128, 8
        $region20: #{_expert_forward_impl.1} parent=11 // pred_fallthru
          _
        // Predicated region
        $region21: #{_expert_forward_impl.1} parent=11 // pred_check
          %p202 = pneg %p131
        $region22: #{_expert_forward_impl.1} parent=11 // pred_check_branch
          %204 = sbr.rel (%p202) target = $region24
        $region23: #{_expert_forward_impl.1} parent=11 // pred_region
          %s205 = smul.u32 16, %s25
          %s207 = ssub.s32 2048, 2048
          %208 = vsyncadd [#allocation7], %s207
          %s209 = smul.addr %s205, 128
          %s210 = scalar_lea.hbm %s3, %s209
          %s211 = sshll.u32 [#allocation8], 4
          %s212 = int_to_ptr.vmem [resolvable:$true] %s211
          %217 = dma.hbm_to_vmem [thread:$0]  %s210, 2048, %s212, [#allocation7], 128, 128, 8
        $region24: #{_expert_forward_impl.1} parent=11 // pred_fallthru
          _
      $region12: #{_expert_forward_impl.1} parent=5 // pred_fallthru
        _
      %p218 = scmp.lt.s32.totalorder %s15, 2
      // Predicated region
      $region25: #{_expert_forward_impl.1} parent=5 // pred_check
        %p219 = pneg %p218
      $region26: #{_expert_forward_impl.1} parent=5 // pred_check_branch
        %221 = sbr.rel (%p219) target = $region28
      $region27: #{_expert_forward_impl.1} parent=5 // pred_region
        // Predicated region
        $region29: #{_expert_forward_impl.1} parent=27 // pred_check
          %p222 = pneg %p47
        $region30: #{_expert_forward_impl.1} parent=27 // pred_check_branch
          %224 = sbr.rel (%p222) target = $region32
        $region31: #{_expert_forward_impl.1} parent=27 // pred_region
          %p225 = scmp.lt.s32.totalorder %s22, 1
          %s226 = scalar_select %p225, %s22, 1
          %s227 = smul.addr %s226, 8
          %s228 = scalar_lea.vmem %s0, %s227
        $region32: #{_expert_forward_impl.1} parent=27 // pred_fallthru
          _
      $region28: #{_expert_forward_impl.1} parent=5 // pred_fallthru
        _
      %p229 = scmp.le.s32.totalorder 1, %s15
      %p230 = scmp.lt.s32.totalorder %s15, 3
      %p231 = pnand %p229, %p230
      %p232 = pneg %p231
      // Predicated region
      $region33: #{_expert_forward_impl.1} parent=5 // pred_check
        _
      $region34: #{_expert_forward_impl.1} parent=5 // pred_check_branch
        %234 = sbr.rel (%p231) target = $region36
      $region35: #{_expert_forward_impl.1} parent=5 // pred_region
        %s235 = ssub.s32 %s15, 1
        // Predicated region
        $region37: #{_expert_forward_impl.1} parent=35 // pred_check
          %p236 = pneg %p79
        $region38: #{_expert_forward_impl.1} parent=35 // pred_check_branch
          %238 = sbr.rel (%p236) target = $region40
        $region39: #{_expert_forward_impl.1} parent=35 // pred_region
          %239 = dma.done [#allocation4], 2048
        $region40: #{_expert_forward_impl.1} parent=35 // pred_fallthru
          _
        // Predicated region
        $region41: #{_expert_forward_impl.1} parent=35 // pred_check
          %p240 = pneg %p105
        $region42: #{_expert_forward_impl.1} parent=35 // pred_check_branch
          %242 = sbr.rel (%p240) target = $region44
        $region43: #{_expert_forward_impl.1} parent=35 // pred_region
          %243 = dma.done [#allocation7], 2048
        $region44: #{_expert_forward_impl.1} parent=35 // pred_fallthru
          _
        // Predicated region
        $region45: #{_expert_forward_impl.1} parent=35 // pred_check
          %p244 = pneg %p131
        $region46: #{_expert_forward_impl.1} parent=35 // pred_check_branch
          %246 = sbr.rel (%p244) target = $region48
        $region47: #{_expert_forward_impl.1} parent=35 // pred_region
          %247 = dma.done [#allocation7], 2048
        $region48: #{_expert_forward_impl.1} parent=35 // pred_fallthru
          _
        %p248 = scmp.lt.s32.totalorder %s24, 1
        %s249 = scalar_select %p248, %s24, 1
        %s250 = smul.addr %s249, 8
        %s251 = scalar_lea.vmem %s0, %s250
        %p252 = pneg %p53
        %p253 = pneg %p50
        %p254 = pneg %p79
        %p255 = pneg %p76
        %p256 = pneg %p105
        %p257 = pneg %p102
        %p258 = pneg %p131
        %p259 = pneg %p128
        %p260 = pneg %p157
        %p261 = pneg %p154
        %s262 = sand.u32 %s144, 1
        %s263 = scalar_lea.sflag [#allocation5], %s262
        %s264 = sand.u32 %s144, 1
        %s265 = smul.addr %s264, 8
        %s266 = scalar_lea.vmem [#allocation9], %s265
        %p267 = scmp.lt.s32.totalorder %s24, 1
        %s268 = scalar_select %p267, %s24, 1
        %s269 = smul.addr %s268, 8
        %s270 = scalar_lea.vmem %s0, %s269
        %s271 = smul.u32 16, %s25
        %v272 = vld [vmem:[%s270] sm:$0xff]
        %v273 = vld [vmem:[#allocation3] sm:$0xff]
        %v274 = vld [vmem:[#allocation3 + $0x8] sm:$0xff]
        %v275 = vld [vmem:[#allocation3 + $0x10] sm:$0xff]
        %v276 = vld [vmem:[#allocation3 + $0x18] sm:$0xff]
        %v277 = vld [vmem:[#allocation3 + $0x20] sm:$0xff]
        %v278 = vld [vmem:[#allocation3 + $0x28] sm:$0xff]
        %v279 = vld [vmem:[#allocation3 + $0x30] sm:$0xff]
        %v280 = vld [vmem:[#allocation3 + $0x38] sm:$0xff]
        %v281 = vld [vmem:[#allocation3 + $0x40] sm:$0xff]
        %v282 = vld [vmem:[#allocation3 + $0x48] sm:$0xff]
        %v283 = vld [vmem:[#allocation3 + $0x50] sm:$0xff]
        %v284 = vld [vmem:[#allocation3 + $0x58] sm:$0xff]
        %v285 = vld [vmem:[#allocation3 + $0x60] sm:$0xff]
        %v286 = vld [vmem:[#allocation3 + $0x68] sm:$0xff]
        %v287 = vld [vmem:[#allocation3 + $0x70] sm:$0xff]
        %v288 = vld [vmem:[#allocation3 + $0x78] sm:$0xff]
        %289 = vmatprep.subr.mxu0 0.0
        %290 = vmatpush1.msra.mxu0 %v273
        %291 = vmatprep.subr.mxu0 0.0
        %292 = vmatpush1.msra.mxu0 %v274
        %293 = vmatprep.subr.mxu0 0.0
        %294 = vmatpush1.msra.mxu0 %v275
        %295 = vmatprep.subr.mxu0 0.0
        %296 = vmatpush1.msra.mxu0 %v276
        %297 = vmatprep.subr.mxu0 0.0
        %298 = vmatpush1.msra.mxu0 %v277
        %299 = vmatprep.subr.mxu0 0.0
        %300 = vmatpush1.msra.mxu0 %v278
        %301 = vmatprep.subr.mxu0 0.0
        %302 = vmatpush1.msra.mxu0 %v279
        %303 = vmatprep.subr.mxu0 0.0
        %304 = vmatpush1.msra.mxu0 %v280
        %305 = vmatprep.subr.mxu0 0.0
        %306 = vmatpush1.msra.mxu0 %v281
        %307 = vmatprep.subr.mxu0 0.0
        %308 = vmatpush1.msra.mxu0 %v282
        %309 = vmatprep.subr.mxu0 0.0
        %310 = vmatpush1.msra.mxu0 %v283
        %311 = vmatprep.subr.mxu0 0.0
        %312 = vmatpush1.msra.mxu0 %v284
        %313 = vmatprep.subr.mxu0 0.0
        %314 = vmatpush1.msra.mxu0 %v285
        %315 = vmatprep.subr.mxu0 0.0
        %316 = vmatpush1.msra.mxu0 %v286
        %317 = vmatprep.subr.mxu0 0.0
        %318 = vmatpush1.msra.mxu0 %v287
        %319 = vmatprep.subr.mxu0 0.0
        %320 = vmatpush1.msra.mxu0 %v288
        %321 = vmatprep.subr.mxu0 0.0
        %322 = vmatpush1.msra.mxu0 0.0
        %323 = vmatprep.subr.mxu0 0.0
        %324 = vmatpush1.msra.mxu0 0.0
        %325 = vmatprep.subr.mxu0 0.0
        %326 = vmatpush1.msra.mxu0 0.0
        %327 = vmatprep.subr.mxu0 0.0
        %328 = vmatpush1.msra.mxu0 0.0
        %329 = vmatprep.subr.mxu0 0.0
        %330 = vmatpush1.msra.mxu0 0.0
        %331 = vmatprep.subr.mxu0 0.0
        %332 = vmatpush1.msra.mxu0 0.0
        %333 = vmatprep.subr.mxu0 0.0
        %334 = vmatpush1.msra.mxu0 0.0
        %335 = vmatprep.subr.mxu0 0.0
        %336 = vmatpush1.msra.mxu0 0.0
        %337 = vmatprep.subr.mxu0 0.0
        %338 = vmatpush1.msra.mxu0 0.0
        %339 = vmatprep.subr.mxu0 0.0
        %340 = vmatpush1.msra.mxu0 0.0
        %341 = vmatprep.subr.mxu0 0.0
        %342 = vmatpush1.msra.mxu0 0.0
        %343 = vmatprep.subr.mxu0 0.0
        %344 = vmatpush1.msra.mxu0 0.0
        %345 = vmatprep.subr.mxu0 0.0
        %346 = vmatpush1.msra.mxu0 0.0
        %347 = vmatprep.subr.mxu0 0.0
        %348 = vmatpush1.msra.mxu0 0.0
        %349 = vmatprep.subr.mxu0 0.0
        %350 = vmatpush1.msra.mxu0 0.0
        %351 = vmatprep.subr.mxu0 0.0
        %352 = vmatpush1.msra.mxu0 0.0
        %353 = vmatprep.mubr.f32.mxu0 0.0
        %354 = vmatmul.mubr.f32.gmra.mrb[0].mxu0 %v272
        %v355 = vpop.f32.mrb[0].mxu0
        %v356 = vadd.f32 0.0, %v355
        %v357 = vpop.f32.mrb[0].mxu0
        %358 = vdwg.mxu0
        %v359 = vld [vmem:[#allocation6] sm:$0xff]
        %v360 = vld [vmem:[#allocation6 + $0x8] sm:$0xff]
        %v361 = vld [vmem:[#allocation6 + $0x10] sm:$0xff]
        %v362 = vld [vmem:[#allocation6 + $0x18] sm:$0xff]
        %v363 = vld [vmem:[#allocation6 + $0x20] sm:$0xff]
        %v364 = vld [vmem:[#allocation6 + $0x28] sm:$0xff]
        %v365 = vld [vmem:[#allocation6 + $0x30] sm:$0xff]
        %v366 = vld [vmem:[#allocation6 + $0x38] sm:$0xff]
        %v367 = vld [vmem:[#allocation6 + $0x40] sm:$0xff]
        %v368 = vld [vmem:[#allocation6 + $0x48] sm:$0xff]
        %v369 = vld [vmem:[#allocation6 + $0x50] sm:$0xff]
        %v370 = vld [vmem:[#allocation6 + $0x58] sm:$0xff]
        %v371 = vld [vmem:[#allocation6 + $0x60] sm:$0xff]
        %v372 = vld [vmem:[#allocation6 + $0x68] sm:$0xff]
        %v373 = vld [vmem:[#allocation6 + $0x70] sm:$0xff]
        %v374 = vld [vmem:[#allocation6 + $0x78] sm:$0xff]
        %375 = vmatprep.subr.mxu0 0.0
        %376 = vmatpush1.msra.mxu0 %v359
        %377 = vmatprep.subr.mxu0 0.0
        %378 = vmatpush1.msra.mxu0 %v360
        %379 = vmatprep.subr.mxu0 0.0
        %380 = vmatpush1.msra.mxu0 %v361
        %381 = vmatprep.subr.mxu0 0.0
        %382 = vmatpush1.msra.mxu0 %v362
        %383 = vmatprep.subr.mxu0 0.0
        %384 = vmatpush1.msra.mxu0 %v363
        %385 = vmatprep.subr.mxu0 0.0
        %386 = vmatpush1.msra.mxu0 %v364
        %387 = vmatprep.subr.mxu0 0.0
        %388 = vmatpush1.msra.mxu0 %v365
        %389 = vmatprep.subr.mxu0 0.0
        %390 = vmatpush1.msra.mxu0 %v366
        %391 = vmatprep.subr.mxu0 0.0
        %392 = vmatpush1.msra.mxu0 %v367
        %393 = vmatprep.subr.mxu0 0.0
        %394 = vmatpush1.msra.mxu0 %v368
        %395 = vmatprep.subr.mxu0 0.0
        %396 = vmatpush1.msra.mxu0 %v369
        %397 = vmatprep.subr.mxu0 0.0
        %398 = vmatpush1.msra.mxu0 %v370
        %399 = vmatprep.subr.mxu0 0.0
        %400 = vmatpush1.msra.mxu0 %v371
        %401 = vmatprep.subr.mxu0 0.0
        %402 = vmatpush1.msra.mxu0 %v372
        %403 = vmatprep.subr.mxu0 0.0
        %404 = vmatpush1.msra.mxu0 %v373
        %405 = vmatprep.subr.mxu0 0.0
        %406 = vmatpush1.msra.mxu0 %v374
        %407 = vmatprep.subr.mxu0 0.0
        %408 = vmatpush1.msra.mxu0 0.0
        %409 = vmatprep.subr.mxu0 0.0
        %410 = vmatpush1.msra.mxu0 0.0
        %411 = vmatprep.subr.mxu0 0.0
        %412 = vmatpush1.msra.mxu0 0.0
        %413 = vmatprep.subr.mxu0 0.0
        %414 = vmatpush1.msra.mxu0 0.0
        %415 = vmatprep.subr.mxu0 0.0
        %416 = vmatpush1.msra.mxu0 0.0
        %417 = vmatprep.subr.mxu0 0.0
        %418 = vmatpush1.msra.mxu0 0.0
        %419 = vmatprep.subr.mxu0 0.0
        %420 = vmatpush1.msra.mxu0 0.0
        %421 = vmatprep.subr.mxu0 0.0
        %422 = vmatpush1.msra.mxu0 0.0
        %423 = vmatprep.subr.mxu0 0.0
        %424 = vmatpush1.msra.mxu0 0.0
        %425 = vmatprep.subr.mxu0 0.0
        %426 = vmatpush1.msra.mxu0 0.0
        %427 = vmatprep.subr.mxu0 0.0
        %428 = vmatpush1.msra.mxu0 0.0
        %429 = vmatprep.subr.mxu0 0.0
        %430 = vmatpush1.msra.mxu0 0.0
        %431 = vmatprep.subr.mxu0 0.0
        %432 = vmatpush1.msra.mxu0 0.0
        %433 = vmatprep.subr.mxu0 0.0
        %434 = vmatpush1.msra.mxu0 0.0
        %435 = vmatprep.subr.mxu0 0.0
        %436 = vmatpush1.msra.mxu0 0.0
        %437 = vmatprep.subr.mxu0 0.0
        %438 = vmatpush1.msra.mxu0 0.0
        %439 = vmatprep.mubr.f32.mxu0 0.0
        %440 = vmatmul.mubr.f32.gmra.mrb[0].mxu0 %v272
        %v441 = vpop.f32.mrb[0].mxu0
        %v442 = vadd.f32 0.0, %v441
        %v443 = vpop.f32.mrb[0].mxu0
        %444 = vdwg.mxu0
        %v445 = vxor.u32 %v356, 2147483648
        %v446 = vmul.f32 %v445, 1.442695
        %v447 = vpow.pop %v446
        %v448 = vadd.f32 %v447, 1.0
        %v449 = vrcp.pop %v448
        %v450 = vmul.f32 1.0, %v449
        %v451 = vmul.f32 %v356, %v450
        %v452 = vmul.f32 %v451, %v442
        %v453 = vld [vmem:[#allocation8] sm:$0xff]
        %v454 = vld [vmem:[#allocation8 + $0x8] sm:$0xff]
        %v455 = vld [vmem:[#allocation8 + $0x10] sm:$0xff]
        %v456 = vld [vmem:[#allocation8 + $0x18] sm:$0xff]
        %v457 = vld [vmem:[#allocation8 + $0x20] sm:$0xff]
        %v458 = vld [vmem:[#allocation8 + $0x28] sm:$0xff]
        %v459 = vld [vmem:[#allocation8 + $0x30] sm:$0xff]
        %v460 = vld [vmem:[#allocation8 + $0x38] sm:$0xff]
        %v461 = vld [vmem:[#allocation8 + $0x40] sm:$0xff]
        %v462 = vld [vmem:[#allocation8 + $0x48] sm:$0xff]
        %v463 = vld [vmem:[#allocation8 + $0x50] sm:$0xff]
        %v464 = vld [vmem:[#allocation8 + $0x58] sm:$0xff]
        %v465 = vld [vmem:[#allocation8 + $0x60] sm:$0xff]
        %v466 = vld [vmem:[#allocation8 + $0x68] sm:$0xff]
        %v467 = vld [vmem:[#allocation8 + $0x70] sm:$0xff]
        %v468 = vld [vmem:[#allocation8 + $0x78] sm:$0xff]
        %469 = vmatprep.subr.mxu0 0.0
        %470 = vmatpush1.msra.mxu0 %v453
        %471 = vmatprep.subr.mxu0 0.0
        %472 = vmatpush1.msra.mxu0 %v454
        %473 = vmatprep.subr.mxu0 0.0
        %474 = vmatpush1.msra.mxu0 %v455
        %475 = vmatprep.subr.mxu0 0.0
        %476 = vmatpush1.msra.mxu0 %v456
        %477 = vmatprep.subr.mxu0 0.0
        %478 = vmatpush1.msra.mxu0 %v457
        %479 = vmatprep.subr.mxu0 0.0
        %480 = vmatpush1.msra.mxu0 %v458
        %481 = vmatprep.subr.mxu0 0.0
        %482 = vmatpush1.msra.mxu0 %v459
        %483 = vmatprep.subr.mxu0 0.0
        %484 = vmatpush1.msra.mxu0 %v460
        %485 = vmatprep.subr.mxu0 0.0
        %486 = vmatpush1.msra.mxu0 %v461
        %487 = vmatprep.subr.mxu0 0.0
        %488 = vmatpush1.msra.mxu0 %v462
        %489 = vmatprep.subr.mxu0 0.0
        %490 = vmatpush1.msra.mxu0 %v463
        %491 = vmatprep.subr.mxu0 0.0
        %492 = vmatpush1.msra.mxu0 %v464
        %493 = vmatprep.subr.mxu0 0.0
        %494 = vmatpush1.msra.mxu0 %v465
        %495 = vmatprep.subr.mxu0 0.0
        %496 = vmatpush1.msra.mxu0 %v466
        %497 = vmatprep.subr.mxu0 0.0
        %498 = vmatpush1.msra.mxu0 %v467
        %499 = vmatprep.subr.mxu0 0.0
        %500 = vmatpush1.msra.mxu0 %v468
        %501 = vmatprep.subr.mxu0 0.0
        %502 = vmatpush1.msra.mxu0 0.0
        %503 = vmatprep.subr.mxu0 0.0
        %504 = vmatpush1.msra.mxu0 0.0
        %505 = vmatprep.subr.mxu0 0.0
        %506 = vmatpush1.msra.mxu0 0.0
        %507 = vmatprep.subr.mxu0 0.0
        %508 = vmatpush1.msra.mxu0 0.0
        %509 = vmatprep.subr.mxu0 0.0
        %510 = vmatpush1.msra.mxu0 0.0
        %511 = vmatprep.subr.mxu0 0.0
        %512 = vmatpush1.msra.mxu0 0.0
        %513 = vmatprep.subr.mxu0 0.0
        %514 = vmatpush1.msra.mxu0 0.0
        %515 = vmatprep.subr.mxu0 0.0
        %516 = vmatpush1.msra.mxu0 0.0
        %517 = vmatprep.subr.mxu0 0.0
        %518 = vmatpush1.msra.mxu0 0.0
        %519 = vmatprep.subr.mxu0 0.0
        %520 = vmatpush1.msra.mxu0 0.0
        %521 = vmatprep.subr.mxu0 0.0
        %522 = vmatpush1.msra.mxu0 0.0
        %523 = vmatprep.subr.mxu0 0.0
        %524 = vmatpush1.msra.mxu0 0.0
        %525 = vmatprep.subr.mxu0 0.0
        %526 = vmatpush1.msra.mxu0 0.0
        %527 = vmatprep.subr.mxu0 0.0
        %528 = vmatpush1.msra.mxu0 0.0
        %529 = vmatprep.subr.mxu0 0.0
        %530 = vmatpush1.msra.mxu0 0.0
        %531 = vmatprep.subr.mxu0 0.0
        %532 = vmatpush1.msra.mxu0 0.0
        %533 = vmatprep.mubr.f32.mxu0 0.0
        %534 = vmatmul.mubr.f32.gmra.mrb[0].mxu0 %v452
        %v535 = vpop.f32.mrb[0].mxu0
        %v536 = vadd.f32 0.0, %v535
        %v537 = vpop.f32.mrb[0].mxu0
        %538 = vdwg.mxu0
        %p539 = scmp.eq.s32.totalorder %s25, 0
        // Predicated region
        $region49: #{_expert_forward_impl.1} parent=35 // pred_check
          %p540 = pneg %p539
        $region50: #{_expert_forward_impl.1} parent=35 // pred_check_branch
          %542 = sbr.rel (%p540) target = $region52
        $region51: #{_expert_forward_impl.1} parent=35 // pred_region
          %543 = vst [vmem:[#allocation2] sm:$0xff] %v536
        $region52: #{_expert_forward_impl.1} parent=35 // pred_fallthru
          _
        %p544 = scmp.gt.s32.totalorder %s25, 0
        // Predicated region
        $region53: #{_expert_forward_impl.1} parent=35 // pred_check
          %p545 = pneg %p544
        $region54: #{_expert_forward_impl.1} parent=35 // pred_check_branch
          %547 = sbr.rel (%p545) target = $region56
        $region55: #{_expert_forward_impl.1} parent=35 // pred_region
          %v548 = vld [vmem:[#allocation2] sm:$0xff]
          %v549 = vadd.f32 %v548, %v536
          %550 = vst [vmem:[#allocation2] sm:$0xff] %v549
        $region56: #{_expert_forward_impl.1} parent=35 // pred_fallthru
          _
        // Predicated region
        $region57: #{_expert_forward_impl.1} parent=35 // pred_check
          %p551 = pneg %p539
        $region58: #{_expert_forward_impl.1} parent=35 // pred_check_branch
          %553 = sbr.rel (%p551) target = $region60
        $region59: #{_expert_forward_impl.1} parent=35 // pred_region
          %v554 = vld [vmem:[#allocation2] sm:$0xff]
          %555 = vst [vmem:[%s266] sm:$0xff] %v554
        $region60: #{_expert_forward_impl.1} parent=35 // pred_fallthru
          _
        %s556 = sand.u32 %s144, 1
        %s557 = scalar_lea.sflag [#allocation5], %s556
        %s558 = sand.u32 %s144, 1
        %s559 = smul.addr %s558, 8
        %s560 = scalar_lea.vmem [#allocation9], %s559
        // Predicated region
        $region61: #{_expert_forward_impl.1} parent=35 // pred_check
          %p561 = pneg %p154
        $region62: #{_expert_forward_impl.1} parent=35 // pred_check_branch
          %563 = sbr.rel (%p561) target = $region64
        $region63: #{_expert_forward_impl.1} parent=35 // pred_region
          %s565 = ssub.s32 128, 128
          %566 = vsyncadd %s557, %s565
          %s567 = smul.addr %s24, 128
          %s568 = scalar_lea.hbm %s4, %s567
          %s570 = sshll.u32 %s560, 4
          %s571 = int_to_ptr.vmem [resolvable:$true] %s570
          %573 = dma.vmem_to_hbm [thread:$0]  %s571, 128, %s568, %s557
        $region64: #{_expert_forward_impl.1} parent=35 // pred_fallthru
          _
      $region36: #{_expert_forward_impl.1} parent=5 // pred_fallthru
        _
      %p574 = scmp.le.s32.totalorder 2, %s15
      // Predicated region
      $region65: #{_expert_forward_impl.1} parent=5 // pred_check
        %p575 = pneg %p574
      $region66: #{_expert_forward_impl.1} parent=5 // pred_check_branch
        %577 = sbr.rel (%p575) target = $region68
      $region67: #{_expert_forward_impl.1} parent=5 // pred_region
        %s578 = ssub.s32 %s15, 2
        // Predicated region
        $region69: #{_expert_forward_impl.1} parent=67 // pred_check
          %p579 = pneg %p160
        $region70: #{_expert_forward_impl.1} parent=67 // pred_check_branch
          %581 = sbr.rel (%p579) target = $region72
        $region71: #{_expert_forward_impl.1} parent=67 // pred_region
          %s582 = sand.u32 %s145, 1
          %s583 = scalar_lea.sflag [#allocation5], %s582
          %s584 = sand.u32 %s145, 1
          %s585 = smul.addr %s584, 8
          %s586 = scalar_lea.vmem [#allocation9], %s585
          %587 = dma.done %s583, 128
        $region72: #{_expert_forward_impl.1} parent=67 // pred_fallthru
          _
      $region68: #{_expert_forward_impl.1} parent=5 // pred_fallthru
        _
    $region6: #{_expert_forward_impl.1} parent=1 // loop_footer
      %s19 = sadd.s32 1, %s15
    $region7: #{_expert_forward_impl.1} parent=1 // loop_footer_branch
      %14 = sbr.rel target = $region3
    $region8: #{_expert_forward_impl.1} parent=1 // loop_exit
      _
    %588 = vsyncpa [#allocation4], 1
    %s589 = scalar_lea.sflag [#allocation4], 1
    %590 = vsyncpa %s589, 1
    %591 = vsyncpa [#allocation7], 1
    %592 = vsyncpa [#allocation5], 1
    %s593 = scalar_lea.sflag [#allocation5], 1
    %594 = vsyncpa %s593, 1

</llo_original>
